<compile_context>
chip_gen: v5e
topology: v5e:2x2
jax: 0.10.0
libtpu: 0.0.40
codegen_flags: <defaults>
</compile_context>

<pallas_src>
import functools

import numpy as np
import jax
import jax.numpy as jnp
from jax.experimental import pallas as pl
from jax.experimental.pallas import tpu as pltpu

# ----------------------------- XDoG parameters ------------------------------
SIGMA1, SIGMA2 = 1.8, 2.5
SHARPEN, PHI, EPS = 28.0, 1.051, 10.7
R_COEF, G_COEF, B_COEF = 0.2126, 0.7152, 0.0722

# Max images folded into one grid step (bounds the static unroll of the
# per-image vertical matmul inside the kernel body).
_MAX_BATCH_PER_STEP = 8


def _gaussian_1d(sigma: float):
    """Normalized 1D Gaussian taps and half-width (radius)."""
    radius = int(np.ceil(3.0 * sigma))
    xs = np.arange(-radius, radius + 1, dtype=np.float64)
    w = np.exp(-(xs ** 2) / (2.0 * sigma ** 2))
    return w / w.sum(), radius


W1, P1 = _gaussian_1d(SIGMA1)   # 13 taps, radius 6
W2, P2 = _gaussian_1d(SIGMA2)   # 17 taps, radius 8


def _band_matrix(n: int, taps, radius: int) -> np.ndarray:
    """Symmetric band matrix for zero-padded 'same' separable blur.

    horizontal: blurred = g @ K        vertical: blurred = K @ g
    """
    k = np.zeros((n, n), dtype=np.float64)
    for off, wv in zip(range(-radius, radius + 1), taps):
        k += wv * np.eye(n, k=off, dtype=np.float64)
    return k


# --------------------------- kernel: XDoG response ---------------------------
def _xdog_response_kernel(x_ref, kwcat_ref, khcat_ref, res_ref, max_ref):
    """One grid step: XDoG response + running max for a block of BT images."""
    bt, _, h, w = x_ref.shape
    x = x_ref[...].astype(jnp.float32)                                # (BT,3,H,W)
    gray = x[:, 0] * R_COEF + x[:, 1] * G_COEF + x[:, 2] * B_COEF     # (BT,H,W)

    # Horizontal blur for both sigmas and all BT images in ONE MXU matmul:
    #   [tmp1 | tmp2] = gray_rows @ [Kw1 | Kw2]
    t = jnp.dot(gray.reshape(bt * h, w), kwcat_ref[...],
                preferred_element_type=jnp.float32)                   # (BT*H,2W)
    t = t.reshape(bt, h, 2 * w)

    khcat = khcat_ref[...]                                            # (H, 2H)
    blk_max = jnp.zeros((1, 1), jnp.float32)                          # res > 0 always
    for b in range(bt):                                               # static unroll
        # Vertical blur of both branches fused into one matmul; the XDoG
        # scalars (s+1)/(-s) are folded into khcat, so this IS scaled_diff.
        stacked = jnp.concatenate([t[b, :, :w], t[b, :, w:]], axis=0)  # (2H, W)
        scaled_diff = jnp.dot(khcat, stacked,
                              preferred_element_type=jnp.float32)      # (H, W)

        prod = gray[b] * scaled_diff
        # soft = 1 + tanh(phi * (255*prod - eps)); the module's trailing *255
        # on `res` cancels in the final res / res.max() and is dropped.
        soft = 1.0 + jnp.tanh((PHI * 255.0) * prod - PHI * EPS)
        res = jnp.where(prod > EPS, 1.0, soft)                         # (H, W)

        res_ref[b] = res.astype(res_ref.dtype)
        blk_max = jnp.maximum(blk_max, jnp.max(res).reshape(1, 1))

    max_ref[...] = blk_max.reshape(1, 1, 1)


# --------------------------- feature / budget probes --------------------------
def _probe_copy_kernel(x_ref, o_ref):
    o_ref[...] = x_ref[...]


@functools.lru_cache(maxsize=None)
def _single_buffer_supported() -> bool:
    """Feature-probe: does pipeline_mode=pl.Buffered(1) lower on this backend?"""
    if not hasattr(pl, "Buffered"):
        return False
    try:
        fn = pl.pallas_call(
            _probe_copy_kernel,
            out_shape=jax.ShapeDtypeStruct((16, 128), jnp.float32),
            grid=(2,),
            in_specs=[pl.BlockSpec((8, 128), lambda i: (0, 0),
                                   pipeline_mode=pl.Buffered(1))],
            out_specs=pl.BlockSpec((8, 128), lambda i: (i, 0)),
        )
        jax.block_until_ready(fn(jnp.zeros((8, 128), jnp.float32)))
        return True
    except Exception:                                    # pragma: no cover
        return False


def _vmem_budget_bytes() -> int:
    """~75% of physical VMEM (per generation); conservative 48 MiB fallback."""
    try:
        cap = int(pltpu.get_tpu_info().vmem_capacity_bytes)
        if cap < 32 * 1024 * 1024:
            raise ValueError("implausible VMEM capacity")
    except Exception:
        cap = 64 * 1024 * 1024        # v7x physical VMEM (smallest of v5e/v6e/v7x)
    return (cap * 3) // 4


def _pick_block_batch(b: int, h: int, w: int, budget: int, const_bytes: int) -> int:
    """Largest divisor of B (<= _MAX_BATCH_PER_STEP) whose working set fits."""
    # Rough per-image live set: double-buffered x block + ~10 f32 (H,W)
    # temporaries (gray, tmp1/2, stacked, scaled_diff, prod, soft, res, ...)
    # + double-buffered bf16 res output block.
    per_image = (2 * 3 + 10) * h * w * 4 + 2 * 2 * h * w
    avail = max(budget - 2 * const_bytes, per_image)
    cap = int(max(1, min(b, _MAX_BATCH_PER_STEP, avail // per_image)))
    for bt in range(cap, 0, -1):
        if b % bt == 0:
            return bt
    return 1


# ----------------------------------- wrapper ----------------------------------
def xdog(x: jax.Array) -> jax.Array:
    """x: [B, 3, H, W] float32 RGB batch -> [B, 1, H, W] contour image."""
    B, C, H, W = x.shape
    assert C == 3

    # Fused constants:  kw_cat = [Kw1 | Kw2]               (W, 2W)
    #                   kh_cat = [(s+1)*Kh1 | (-s)*Kh2]    (H, 2H)
    kw_cat = jnp.asarray(
        np.concatenate([_band_matrix(W, W1, P1), _band_matrix(W, W2, P2)],
                       axis=1), dtype=jnp.float32)
    kh_cat = jnp.asarray(
        np.concatenate([(SHARPEN + 1.0) * _band_matrix(H, W1, P1),
                        (-SHARPEN) * _band_matrix(H, W2, P2)],
                       axis=1), dtype=jnp.float32)

    const_bytes = 4 * (W * 2 * W + H * 2 * H)
    budget = _vmem_budget_bytes()
    BT = _pick_block_batch(B, H, W, budget, const_bytes)
    G = B // BT

    # The band matrices never change across grid steps -> single-buffer them
    # when supported (halves their VMEM footprint; biggest relative win on
    # v7x's 64 MiB VMEM). Fall back to default double-buffering otherwise.
    if _single_buffer_supported():
        def _const_spec(shape):
            return pl.BlockSpec(shape, lambda g: (0, 0),
                                pipeline_mode=pl.Buffered(1))
    else:
        def _const_spec(shape):
            return pl.BlockSpec(shape, lambda g: (0, 0))

    res, bmax = pl.pallas_call(
        _xdog_response_kernel,
        out_shape=(
            # bf16 intermediate: res in (0, 2], ~0.4% quantization is far
            # inside the validation tolerance, and it halves the HBM traffic
            # of this store + the epilogue's read (largest relative win on
            # v5e's HBM bandwidth).
            jax.ShapeDtypeStruct((B, H, W), jnp.bfloat16),
            jax.ShapeDtypeStruct((G, 1, 1), jnp.float32),
        ),
        grid=(G,),
        in_specs=[
            pl.BlockSpec((BT, 3, H, W), lambda g: (g, 0, 0, 0)),
            _const_spec((W, 2 * W)),
            _const_spec((H, 2 * H)),
        ],
        out_specs=(
            # NOTE: lane-dense whenever W % 128 == 0 (production image sizes);
            # tiny test images (W=16) are deliberately NOT padded to 128 since
            # the 8x extra HBM bytes outweigh removing the masked partial store.
            pl.BlockSpec((BT, H, W), lambda g: (g, 0, 0)),
            pl.BlockSpec((1, 1, 1), lambda g: (g, 0, 0)),
        ),
        compiler_params=pltpu.CompilerParams(
            dimension_semantics=("parallel",),
            vmem_limit_bytes=int(budget)),
    )(x, kw_cat, kh_cat)

    # Global-max normalization as a trivial XLA epilogue (the per-step maxes
    # were computed for free while `res` was still in registers); replaces the
    # old bandwidth-bound second pallas_call.
    scale = 1.0 / jnp.max(bmax)
    return (res.astype(jnp.float32) * scale)[:, None, :, :]


# ----------------------- host reference (float64 numpy) -----------------------
def _xdog_ref_np(x_np: np.ndarray) -> np.ndarray:
    x = np.asarray(x_np, dtype=np.float64)
    _, _, H, W = x.shape
    gray = x[:, 0] * R_COEF + x[:, 1] * G_COEF + x[:, 2] * B_COEF     # (B,H,W)

    def blur(img, taps, radius):
        kh = _band_matrix(H, taps, radius)
        kw = _band_matrix(W, taps, radius)
        return np.einsum("hk,bkl,lw->bhw", kh, img, kw)

    img1 = blur(gray, W1, P1)
    img2 = blur(gray, W2, P2)
    scaled_diff = (SHARPEN + 1.0) * img1 - SHARPEN * img2
    sharpened = gray * scaled_diff * 255.0
    mask = (gray * scaled_diff - EPS) > 0.0
    soft = 1.0 + np.tanh(PHI * (sharpened - EPS))
    res = np.where(mask, 1.0, soft) * 255.0
    res = res / res.max()
    return res[:, None].astype(np.float32)


# ------------------------------------ main ------------------------------------
if __name__ == "__main__":
    key = jax.random.PRNGKey(0)
    B, H, W = 2, 16, 16
    x = jax.random.uniform(key, (B, 3, H, W), dtype=jnp.float32)

    out = jax.block_until_ready(jax.jit(xdog)(x))
    assert out.shape == (B, 1, H, W) and out.dtype == jnp.float32

    ref = _xdog_ref_np(np.asarray(x))
    # Tolerance: XDoG's soft threshold amplifies rounding near the crossing,
    # and the intermediate `res` is stored as bf16 (<= ~0.4% of values in
    # (0, 2]); both effects are well inside 2e-2.
    np.testing.assert_allclose(np.asarray(out), ref, rtol=2e-2, atol=2e-2)
    print("KERNEL_OK")
</pallas_src>

<mosaic_0001>
module attributes {stable_mosaic.version = 11 : i64} {
  func.func @_xdog_response_kernel(%arg0: i32, %arg1: memref<2x3x16x16xf32, #tpu.memory_space<vmem>>, %arg2: memref<16x32xf32, #tpu.memory_space<vmem>>, %arg3: memref<16x32xf32, #tpu.memory_space<vmem>>, %arg4: memref<2x16x16xbf16, #tpu.memory_space<vmem>>, %arg5: memref<1x1x1xf32, #tpu.memory_space<vmem>>) attributes {dimension_semantics = [#tpu.dimension_semantics<parallel>], iteration_bounds = array<i64: 1>, scalar_prefetch = 0 : i64, scratch_operands = 0 : i64, tpu.core_type = #tpu.core_type<tc>, window_params = [{transform_indices = @transform_0, window_bounds = array<i64: 2, 3, 16, 16>}, {pipeline_mode = #tpu.pipeline_mode<synchronous>, transform_indices = @transform_1, window_bounds = array<i64: 16, 32>}, {pipeline_mode = #tpu.pipeline_mode<synchronous>, transform_indices = @transform_2, window_bounds = array<i64: 16, 32>}, {transform_indices = @transform_3, window_bounds = array<i64: 2, 16, 16>}, {transform_indices = @transform_4, window_bounds = array<i64: 1, 1, 1>}]} {
    %c0 = arith.constant 0 : index
    %c0_0 = arith.constant 0 : index
    %c0_1 = arith.constant 0 : index
    %c0_2 = arith.constant 0 : index
    %0 = vector.load %arg1[%c0, %c0_0, %c0_1, %c0_2] : memref<2x3x16x16xf32, #tpu.memory_space<vmem>>, vector<2x3x16x16xf32>
    %1 = vector.extract_strided_slice %0 {offsets = [0, 0, 0, 0], sizes = [2, 1, 16, 16], strides = [1, 1, 1, 1]} : vector<2x3x16x16xf32> to vector<2x1x16x16xf32>
    %2 = vector.shape_cast %1 : vector<2x1x16x16xf32> to vector<2x16x16xf32>
    %cst = arith.constant 2.126000e-01 : f32
    %3 = vector.broadcast %cst : f32 to vector<2x16x16xf32>
    %4 = arith.mulf %2, %3 : vector<2x16x16xf32>
    %5 = vector.extract_strided_slice %0 {offsets = [0, 1, 0, 0], sizes = [2, 1, 16, 16], strides = [1, 1, 1, 1]} : vector<2x3x16x16xf32> to vector<2x1x16x16xf32>
    %6 = vector.shape_cast %5 : vector<2x1x16x16xf32> to vector<2x16x16xf32>
    %cst_3 = arith.constant 7.152000e-01 : f32
    %7 = vector.broadcast %cst_3 : f32 to vector<2x16x16xf32>
    %8 = arith.mulf %6, %7 : vector<2x16x16xf32>
    %9 = arith.addf %4, %8 : vector<2x16x16xf32>
    %10 = vector.extract_strided_slice %0 {offsets = [0, 2, 0, 0], sizes = [2, 1, 16, 16], strides = [1, 1, 1, 1]} : vector<2x3x16x16xf32> to vector<2x1x16x16xf32>
    %11 = vector.shape_cast %10 : vector<2x1x16x16xf32> to vector<2x16x16xf32>
    %cst_4 = arith.constant 7.220000e-02 : f32
    %12 = vector.broadcast %cst_4 : f32 to vector<2x16x16xf32>
    %13 = arith.mulf %11, %12 : vector<2x16x16xf32>
    %14 = arith.addf %9, %13 : vector<2x16x16xf32>
    %15 = vector.shape_cast %14 : vector<2x16x16xf32> to vector<32x16xf32>
    %c0_5 = arith.constant 0 : index
    %c0_6 = arith.constant 0 : index
    %16 = vector.load %arg2[%c0_5, %c0_6] : memref<16x32xf32, #tpu.memory_space<vmem>>, vector<16x32xf32>
    %cst_7 = arith.constant dense<0.000000e+00> : vector<32x32xf32>
    %17 = tpu.matmul %15, %16, %cst_7 {dimension_numbers = #tpu.dot_dimension_numbers<[1], [0], [0], [1], [0, 0, 1, 1], [], []>} : vector<32x16xf32>, vector<16x32xf32>, vector<32x32xf32> -> vector<32x32xf32>
    %18 = vector.shape_cast %17 : vector<32x32xf32> to vector<2x16x32xf32>
    %c0_8 = arith.constant 0 : index
    %c0_9 = arith.constant 0 : index
    %19 = vector.load %arg3[%c0_8, %c0_9] : memref<16x32xf32, #tpu.memory_space<vmem>>, vector<16x32xf32>
    %cst_10 = arith.constant 0.000000e+00 : f32
    %20 = vector.broadcast %cst_10 : f32 to vector<1x1xf32>
    %21 = vector.extract_strided_slice %18 {offsets = [0, 0, 0], sizes = [1, 16, 16], strides = [1, 1, 1]} : vector<2x16x32xf32> to vector<1x16x16xf32>
    %22 = vector.shape_cast %21 : vector<1x16x16xf32> to vector<16x16xf32>
    %23 = vector.extract_strided_slice %18 {offsets = [0, 0, 16], sizes = [1, 16, 16], strides = [1, 1, 1]} : vector<2x16x32xf32> to vector<1x16x16xf32>
    %24 = vector.shape_cast %23 : vector<1x16x16xf32> to vector<16x16xf32>
    %25 = tpu.concatenate %22, %24 in 0 : vector<16x16xf32>, vector<16x16xf32> -> vector<32x16xf32>
    %cst_11 = arith.constant dense<0.000000e+00> : vector<16x16xf32>
    %26 = tpu.matmul %19, %25, %cst_11 {dimension_numbers = #tpu.dot_dimension_numbers<[1], [0], [0], [1], [0, 0, 1, 1], [], []>} : vector<16x32xf32>, vector<32x16xf32>, vector<16x16xf32> -> vector<16x16xf32>
    %27 = vector.extract_strided_slice %14 {offsets = [0, 0, 0], sizes = [1, 16, 16], strides = [1, 1, 1]} : vector<2x16x16xf32> to vector<1x16x16xf32>
    %28 = vector.shape_cast %27 : vector<1x16x16xf32> to vector<16x16xf32>
    %29 = arith.mulf %28, %26 : vector<16x16xf32>
    %cst_12 = arith.constant 2.680050e+02 : f32
    %30 = vector.broadcast %cst_12 : f32 to vector<16x16xf32>
    %31 = arith.mulf %30, %29 : vector<16x16xf32>
    %cst_13 = arith.constant 1.124570e+01 : f32
    %32 = vector.broadcast %cst_13 : f32 to vector<16x16xf32>
    %33 = arith.subf %31, %32 : vector<16x16xf32>
    %34 = math.tanh %33 : vector<16x16xf32>
    %cst_14 = arith.constant 1.000000e+00 : f32
    %35 = vector.broadcast %cst_14 : f32 to vector<16x16xf32>
    %36 = arith.addf %35, %34 : vector<16x16xf32>
    %cst_15 = arith.constant 1.070000e+01 : f32
    %37 = vector.broadcast %cst_15 : f32 to vector<16x16xf32>
    %38 = arith.cmpf ogt, %29, %37 : vector<16x16xf32>
    %cst_16 = arith.constant 1.000000e+00 : f32
    %39 = vector.broadcast %cst_16 : f32 to vector<16x16xf32>
    %40 = arith.select %38, %39, %36 : vector<16x16xi1>, vector<16x16xf32>
    %41 = arith.truncf %40 : vector<16x16xf32> to vector<16x16xbf16>
    %c0_17 = arith.constant 0 : index
    %c0_18 = arith.constant 0 : index
    %c0_19 = arith.constant 0 : index
    %42 = vector.load %arg4[%c0_17, %c0_18, %c0_19] : memref<2x16x16xbf16, #tpu.memory_space<vmem>>, vector<1x16x16xbf16>
    %43 = vector.shape_cast %42 : vector<1x16x16xbf16> to vector<16x16xbf16>
    %44 = vector.shape_cast %41 : vector<16x16xbf16> to vector<1x16x16xbf16>
    tpu.vector_store %arg4[%c0_17, %c0_18, %c0_19], %44 {strides = array<i32>} : memref<2x16x16xbf16, #tpu.memory_space<vmem>>, vector<1x16x16xbf16>,
    %45 = vector.shape_cast %40 : vector<16x16xf32> to vector<1x16x16xf32>
    %cst_20 = arith.constant dense<0xFF800000> : vector<1xf32>
    %46 = vector.multi_reduction <maximumf>, %45, %cst_20 [1, 2] : vector<1x16x16xf32> to vector<1xf32>
    %47 = vector.shape_cast %46 : vector<1xf32> to vector<1x1x1xf32>
    %48 = vector.extract %47[0, 0, 0] : f32 from vector<1x1x1xf32>
    %49 = vector.broadcast %48 : f32 to vector<1x1xf32>
    %50 = arith.maximumf %20, %49 : vector<1x1xf32>
    %51 = vector.extract_strided_slice %18 {offsets = [1, 0, 0], sizes = [1, 16, 16], strides = [1, 1, 1]} : vector<2x16x32xf32> to vector<1x16x16xf32>
    %52 = vector.shape_cast %51 : vector<1x16x16xf32> to vector<16x16xf32>
    %53 = vector.extract_strided_slice %18 {offsets = [1, 0, 16], sizes = [1, 16, 16], strides = [1, 1, 1]} : vector<2x16x32xf32> to vector<1x16x16xf32>
    %54 = vector.shape_cast %53 : vector<1x16x16xf32> to vector<16x16xf32>
    %55 = tpu.concatenate %52, %54 in 0 : vector<16x16xf32>, vector<16x16xf32> -> vector<32x16xf32>
    %cst_21 = arith.constant dense<0.000000e+00> : vector<16x16xf32>
    %56 = tpu.matmul %19, %55, %cst_21 {dimension_numbers = #tpu.dot_dimension_numbers<[1], [0], [0], [1], [0, 0, 1, 1], [], []>} : vector<16x32xf32>, vector<32x16xf32>, vector<16x16xf32> -> vector<16x16xf32>
    %57 = vector.extract_strided_slice %14 {offsets = [1, 0, 0], sizes = [1, 16, 16], strides = [1, 1, 1]} : vector<2x16x16xf32> to vector<1x16x16xf32>
    %58 = vector.shape_cast %57 : vector<1x16x16xf32> to vector<16x16xf32>
    %59 = arith.mulf %58, %56 : vector<16x16xf32>
    %cst_22 = arith.constant 2.680050e+02 : f32
    %60 = vector.broadcast %cst_22 : f32 to vector<16x16xf32>
    %61 = arith.mulf %60, %59 : vector<16x16xf32>
    %cst_23 = arith.constant 1.124570e+01 : f32
    %62 = vector.broadcast %cst_23 : f32 to vector<16x16xf32>
    %63 = arith.subf %61, %62 : vector<16x16xf32>
    %64 = math.tanh %63 : vector<16x16xf32>
    %cst_24 = arith.constant 1.000000e+00 : f32
    %65 = vector.broadcast %cst_24 : f32 to vector<16x16xf32>
    %66 = arith.addf %65, %64 : vector<16x16xf32>
    %cst_25 = arith.constant 1.070000e+01 : f32
    %67 = vector.broadcast %cst_25 : f32 to vector<16x16xf32>
    %68 = arith.cmpf ogt, %59, %67 : vector<16x16xf32>
    %cst_26 = arith.constant 1.000000e+00 : f32
    %69 = vector.broadcast %cst_26 : f32 to vector<16x16xf32>
    %70 = arith.select %68, %69, %66 : vector<16x16xi1>, vector<16x16xf32>
    %71 = arith.truncf %70 : vector<16x16xf32> to vector<16x16xbf16>
    %c1 = arith.constant 1 : index
    %c0_27 = arith.constant 0 : index
    %c0_28 = arith.constant 0 : index
    %72 = vector.load %arg4[%c1, %c0_27, %c0_28] : memref<2x16x16xbf16, #tpu.memory_space<vmem>>, vector<1x16x16xbf16>
    %73 = vector.shape_cast %72 : vector<1x16x16xbf16> to vector<16x16xbf16>
    %74 = vector.shape_cast %71 : vector<16x16xbf16> to vector<1x16x16xbf16>
    tpu.vector_store %arg4[%c1, %c0_27, %c0_28], %74 {strides = array<i32>} : memref<2x16x16xbf16, #tpu.memory_space<vmem>>, vector<1x16x16xbf16>,
    %75 = vector.shape_cast %70 : vector<16x16xf32> to vector<1x16x16xf32>
    %cst_29 = arith.constant dense<0xFF800000> : vector<1xf32>
    %76 = vector.multi_reduction <maximumf>, %75, %cst_29 [1, 2] : vector<1x16x16xf32> to vector<1xf32>
    %77 = vector.shape_cast %76 : vector<1xf32> to vector<1x1x1xf32>
    %78 = vector.extract %77[0, 0, 0] : f32 from vector<1x1x1xf32>
    %79 = vector.broadcast %78 : f32 to vector<1x1xf32>
    %80 = arith.maximumf %50, %79 : vector<1x1xf32>
    %81 = vector.shape_cast %80 : vector<1x1xf32> to vector<1x1x1xf32>
    %c0_30 = arith.constant 0 : index
    %c0_31 = arith.constant 0 : index
    %c0_32 = arith.constant 0 : index
    %82 = vector.load %arg5[%c0_30, %c0_31, %c0_32] : memref<1x1x1xf32, #tpu.memory_space<vmem>>, vector<1x1x1xf32>
    tpu.vector_store %arg5[%c0_30, %c0_31, %c0_32], %81 {strides = array<i32>} : memref<1x1x1xf32, #tpu.memory_space<vmem>>, vector<1x1x1xf32>,
    return
  }
  func.func @transform_0(%arg0: i32) -> (i32, i32, i32, i32) {
    %c0_i32 = arith.constant 0 : i32
    %c0_i32_0 = arith.constant 0 : i32
    %c0_i32_1 = arith.constant 0 : i32
    %c0_i32_2 = arith.constant 0 : i32
    return %arg0, %c0_i32, %c0_i32_0, %c0_i32_1 : i32, i32, i32, i32
  }
  func.func @transform_1(%arg0: i32) -> (i32, i32) {
    %c0_i32 = arith.constant 0 : i32
    %c0_i32_0 = arith.constant 0 : i32
    %c0_i32_1 = arith.constant 0 : i32
    return %c0_i32, %c0_i32_0 : i32, i32
  }
  func.func @transform_2(%arg0: i32) -> (i32, i32) {
    %c0_i32 = arith.constant 0 : i32
    %c0_i32_0 = arith.constant 0 : i32
    %c0_i32_1 = arith.constant 0 : i32
    return %c0_i32, %c0_i32_0 : i32, i32
  }
  func.func @transform_3(%arg0: i32) -> (i32, i32, i32) {
    %c0_i32 = arith.constant 0 : i32
    %c0_i32_0 = arith.constant 0 : i32
    %c0_i32_1 = arith.constant 0 : i32
    return %arg0, %c0_i32, %c0_i32_0 : i32, i32, i32
  }
  func.func @transform_4(%arg0: i32) -> (i32, i32, i32) {
    %c0_i32 = arith.constant 0 : i32
    %c0_i32_0 = arith.constant 0 : i32
    %c0_i32_1 = arith.constant 0 : i32
    return %arg0, %c0_i32, %c0_i32_0 : i32, i32, i32
  }
}

</mosaic_0001>

<llo_original>
// kernel: xdog.1
$region0: #{xdog.1}
  #allocation0 [shape = 'u32[]', space=smem, size = 0x4, offset = 0x4, fixed_abs, tag = 'smem constant byte address 0x4 - core index']
  #allocation1 [shape = 'u32[72,128]{1,0:T(1,128)}', space=vmem, size = 0x9000, scoped, tag = 'internal scratch']
  %s0 = inlined_call_operand.hbm [shape: f32[2,3,16,16], index: 0, kind: input, shape index: {}]
  %s1 = inlined_call_operand.hbm [shape: f32[16,32], index: 1, kind: input, shape index: {}]
  %s2 = inlined_call_operand.hbm [shape: f32[16,32], index: 2, kind: input, shape index: {}]
  %s3 = inlined_call_operand.vmem [shape: bf16[2,16,16], index: 3, kind: output, shape index: {0}]
  %s4 = inlined_call_operand.hbm [shape: f32[1,1,1], index: 4, kind: output, shape index: {1}]
  %5 = xla_tuple %s3, %s4
  %s6 = sld [smem:[#allocation0]]
  $region42: #{xdog.1} parent=0
    _
  %s8 = ssub.s32 1, %s6
  %s9 = scalar_select 0, %s8, %s6
  $region1: #{xdog.1} parent=0
    #allocation2 [shape = 'u8[49152]{0}', space=vmem, size = 0xc000, scoped, tag = 'input window, operand 0, single buffered']
    #allocation3 [shape = 's32[1]{0}', space=sflag, size = 0x4, scoped, tag = 'scoped memory for xdog.1']
    #allocation4 [shape = 's32[1]{0}', space=sflag, size = 0x4, scoped, tag = 'scoped memory for xdog.1']
    #allocation5 [shape = 'u8[8192]{0}', space=vmem, size = 0x2000, scoped, tag = 'input window, operand 1, single buffered']
    #allocation6 [shape = 's32[1]{0}', space=sflag, size = 0x4, scoped, tag = 'scoped memory for xdog.1']
    #allocation7 [shape = 'u8[8192]{0}', space=vmem, size = 0x2000, scoped, tag = 'input window, operand 2, single buffered']
    #allocation8 [shape = 'u8[512]{0}', space=vmem, size = 0x400, scoped, tag = 'output window, operand 1, single buffered']
    %10 = vsyncpa [#allocation3], 0
    %11 = vsyncpa [#allocation6], 0
    %12 = vsyncpa [#allocation4], 0
    // Predicated region
    $region2: #{xdog.1} parent=1 // pred_check
      _
    $region3: #{xdog.1} parent=1 // pred_check_branch
      %14 = sbr.rel (0) target = $region5
    $region4: #{xdog.1} parent=1 // pred_region
      %16 = vsyncadd [#allocation3], 0
      %s17 = sshll.u32 %s0, 4
      %s18 = int_to_ptr.hbm [resolvable:$true] %s17
      %s19 = sshll.u32 [#allocation2], 4
      %s20 = int_to_ptr.vmem [resolvable:$true] %s19
      %25 = dma.hbm_to_vmem [thread:$0]  %s18, 1536, %s20, [#allocation3], 128, 128, 8
    $region5: #{xdog.1} parent=1 // pred_fallthru
      _
    // Predicated region
    $region6: #{xdog.1} parent=1 // pred_check
      _
    $region7: #{xdog.1} parent=1 // pred_check_branch
      %27 = sbr.rel (0) target = $region9
    $region8: #{xdog.1} parent=1 // pred_region
      %29 = vsyncadd [#allocation6], 0
      %s30 = sshll.u32 %s1, 4
      %s31 = int_to_ptr.hbm [resolvable:$true] %s30
      %s32 = sshll.u32 [#allocation5], 4
      %s33 = int_to_ptr.vmem [resolvable:$true] %s32
      %38 = dma.hbm_to_vmem [thread:$0]  %s31, 256, %s33, [#allocation6], 128, 128, 8
    $region9: #{xdog.1} parent=1 // pred_fallthru
      _
    // Predicated region
    $region10: #{xdog.1} parent=1 // pred_check
      _
    $region11: #{xdog.1} parent=1 // pred_check_branch
      %40 = sbr.rel (0) target = $region13
    $region12: #{xdog.1} parent=1 // pred_region
      %42 = vsyncadd [#allocation6], 0
      %s43 = sshll.u32 %s2, 4
      %s44 = int_to_ptr.hbm [resolvable:$true] %s43
      %s45 = sshll.u32 [#allocation7], 4
      %s46 = int_to_ptr.vmem [resolvable:$true] %s45
      %51 = dma.hbm_to_vmem [thread:$0]  %s44, 256, %s46, [#allocation6], 128, 128, 8
    $region13: #{xdog.1} parent=1 // pred_fallthru
      _
    // Predicated region
    $region14: #{xdog.1} parent=1 // pred_check
      _
    $region15: #{xdog.1} parent=1 // pred_check_branch
      %53 = sbr.rel (0) target = $region17
    $region16: #{xdog.1} parent=1 // pred_region
      %55 = dma.done [#allocation3], 1536
    $region17: #{xdog.1} parent=1 // pred_fallthru
      _
    // Predicated region
    $region18: #{xdog.1} parent=1 // pred_check
      _
    $region19: #{xdog.1} parent=1 // pred_check_branch
      %57 = sbr.rel (0) target = $region21
    $region20: #{xdog.1} parent=1 // pred_region
      %59 = dma.done [#allocation6], 256
    $region21: #{xdog.1} parent=1 // pred_fallthru
      _
    // Predicated region
    $region22: #{xdog.1} parent=1 // pred_check
      _
    $region23: #{xdog.1} parent=1 // pred_check_branch
      %61 = sbr.rel (0) target = $region25
    $region24: #{xdog.1} parent=1 // pred_region
      %63 = dma.done [#allocation6], 256
    $region25: #{xdog.1} parent=1 // pred_fallthru
      _
    %v64 = vld [vmem:[#allocation2] sm:$0xff]
    %v65 = vld [vmem:[#allocation2 + $0x8] sm:$0xff]
    %v66 = vld [vmem:[#allocation2 + $0x10] sm:$0xff]
    %v67 = vld [vmem:[#allocation2 + $0x18] sm:$0xff]
    %v68 = vld [vmem:[#allocation2 + $0x20] sm:$0xff]
    %v69 = vld [vmem:[#allocation2 + $0x28] sm:$0xff]
    %v70 = vld [vmem:[#allocation2 + $0x30] sm:$0xff]
    %v71 = vld [vmem:[#allocation2 + $0x38] sm:$0xff]
    %v72 = vld [vmem:[#allocation2 + $0x40] sm:$0xff]
    %v73 = vld [vmem:[#allocation2 + $0x48] sm:$0xff]
    %v74 = vld [vmem:[#allocation2 + $0x50] sm:$0xff]
    %v75 = vld [vmem:[#allocation2 + $0x58] sm:$0xff]
    %v76 = vmul.f32 %v64, 0.2126
    %v77 = vmul.f32 %v65, 0.2126
    %v78 = vmul.f32 %v70, 0.2126
    %v79 = vmul.f32 %v71, 0.2126
    %v80 = vmul.f32 %v66, 0.7152
    %v81 = vmul.f32 %v67, 0.7152
    %v82 = vmul.f32 %v72, 0.7152
    %v83 = vmul.f32 %v73, 0.7152
    %v84 = vadd.f32 %v76, %v80
    %v85 = vadd.f32 %v77, %v81
    %v86 = vadd.f32 %v78, %v82
    %v87 = vadd.f32 %v79, %v83
    %v88 = vmul.f32 %v68, 0.0722
    %v89 = vmul.f32 %v69, 0.0722
    %v90 = vmul.f32 %v74, 0.0722
    %v91 = vmul.f32 %v75, 0.0722
    %v92 = vadd.f32 %v84, %v88
    %v93 = vadd.f32 %v85, %v89
    %v94 = vadd.f32 %v86, %v90
    %v95 = vadd.f32 %v87, %v91
    %v96 = vld [vmem:[#allocation5] sm:$0xff]
    %v97 = vld [vmem:[#allocation5 + $0x8] sm:$0xff]
    %vm98 = vcmask 130048
    %v100 = vsel %vm98, %v92, 0
    %v103 = vsel %vm98, %v93, 0
    %v106 = vsel %vm98, %v94, 0
    %v109 = vsel %vm98, %v95, 0
    %111 = vmatpush.msra.mxu0 0.0
    %112 = vmatpush.msra.mxu0 0.0
    %113 = vmatpush.msra.mxu0 0.0
    %114 = vmatpush.msra.mxu0 0.0
    %115 = vmatpush.msra.mxu0 0.0
    %116 = vmatpush.msra.mxu0 0.0
    %117 = vmatpush.msra.mxu0 0.0
    %118 = vmatpush.msra.mxu0 0.0
    %119 = vmatpush.msra.mxu0 0.0
    %120 = vmatpush.msra.mxu0 0.0
    %121 = vmatpush.msra.mxu0 0.0
    %122 = vmatpush.msra.mxu0 0.0
    %123 = vmatpush.msra.mxu0 0.0
    %124 = vmatpush.msra.mxu0 0.0
    %125 = vmatpush.msra.mxu0 %v97
    %126 = vmatpush.msra.mxu0 %v96
    %127 = vmatmul.f32.gmra.mxu0 %v100
    %v128 = vpop.f32.mrf.mxu0
    %v129 = vadd.f32 0.0, %v128
    %130 = vmatmul.f32.gmra.mxu0 %v103
    %v131 = vpop.f32.mrf.mxu0
    %v132 = vadd.f32 0.0, %v131
    %133 = vmatmul.f32.gmra.mxu0 %v106
    %v134 = vpop.f32.mrf.mxu0
    %v135 = vadd.f32 0.0, %v134
    %136 = vmatmul.f32.gmra.mxu0 %v109
    %v137 = vpop.f32.mrf.mxu0
    %v138 = vadd.f32 0.0, %v137
    %139 = vdwg.mxu0
    %v140 = vld [vmem:[#allocation7] sm:$0xff]
    %v141 = vld [vmem:[#allocation7 + $0x8] sm:$0xff]
    %144 = vrot.lane.b32.xlu0 %v129, 112
    %v145 = vpop.permute.xlu0 %144
    %146 = vrot.lane.b32.xlu0 %v132, 112
    %v147 = vpop.permute.xlu0 %146
    %vm150 = vcmask 261120
    %v152 = vsel %vm150, %v140, 0
    %v155 = vsel %vm150, %v141, 0
    %157 = vmatpush.msra.mxu0 0.0
    %158 = vmatpush.msra.mxu0 0.0
    %159 = vmatpush.msra.mxu0 0.0
    %160 = vmatpush.msra.mxu0 0.0
    %161 = vmatpush.msra.mxu0 0.0
    %162 = vmatpush.msra.mxu0 0.0
    %163 = vmatpush.msra.mxu0 0.0
    %164 = vmatpush.msra.mxu0 0.0
    %165 = vmatpush.msra.mxu0 0.0
    %166 = vmatpush.msra.mxu0 0.0
    %167 = vmatpush.msra.mxu0 0.0
    %168 = vmatpush.msra.mxu0 0.0
    %169 = vmatpush.msra.mxu0 %v147
    %170 = vmatpush.msra.mxu0 %v145
    %171 = vmatpush.msra.mxu0 %v132
    %172 = vmatpush.msra.mxu0 %v129
    %173 = vmatmul.f32.gmra.mxu0 %v152
    %v174 = vpop.f32.mrf.mxu0
    %v175 = vadd.f32 0.0, %v174
    %176 = vmatmul.f32.gmra.mxu0 %v155
    %v177 = vpop.f32.mrf.mxu0
    %v178 = vadd.f32 0.0, %v177
    %179 = vdwg.mxu0
    %v180 = vmul.f32 %v92, %v175
    %v181 = vmul.f32 %v93, %v178
    %v182 = vmul.f32 %v180, 268.005
    %v183 = vmul.f32 %v181, 268.005
    %v184 = vsub.f32 %v182, 11.2457
    %v185 = vsub.f32 %v183, 11.2457
    %v186 = vtanh.pop %v184
    %v187 = vtanh.pop %v185
    %v188 = vadd.f32 %v186, 1.0
    %v189 = vadd.f32 %v187, 1.0
    %vm190 = vcmp.gt.f32.partialorder %v180, 10.7
    %vm191 = vcmp.gt.f32.partialorder %v181, 10.7
    %v192 = vsel %vm190, 1.0, %v188
    %v193 = vsel %vm191, 1.0, %v189
    %v194 = vpack.c.bf16 %v192, %v192
    %v195 = vpack.c.bf16 %v193, %v193
    %vm196 = vcmask 125952
    %197 = vst.msk [vmem:[%s3] sm:$0xf] %vm196, %v194
    %198 = vst.msk [vmem:[%s3 + $0x4] sm:$0xf] %vm196, %v195
    %v199 = vsel %vm98, %v192, -inf
    %v200 = vsel %vm98, %v193, -inf
    %v201 = vmax.f32 %v199, %v200
    %202 = vmax.xlane.f32.xlu0 %v201
    %v203 = vpop.xlane.xlu0 %202
    %v204 = vrot.slane %v203, 4
    %v205 = vmax.f32 %v203, %v204
    %v206 = vrot.slane %v205, 2
    %v207 = vmax.f32 %v205, %v206
    %v208 = vrot.slane %v207, 1
    %v209 = vmax.f32 %v207, %v208
    %s210 = vtos %v209
    %v211 = vstv %s210
    %v212 = vmax.f32 %v211, 0.0
    %215 = vrot.lane.b32.xlu0 %v135, 112
    %v216 = vpop.permute.xlu0 %215
    %217 = vrot.lane.b32.xlu0 %v138, 112
    %v218 = vpop.permute.xlu0 %217
    %221 = vmatpush.msra.mxu0 0.0
    %222 = vmatpush.msra.mxu0 0.0
    %223 = vmatpush.msra.mxu0 0.0
    %224 = vmatpush.msra.mxu0 0.0
    %225 = vmatpush.msra.mxu0 0.0
    %226 = vmatpush.msra.mxu0 0.0
    %227 = vmatpush.msra.mxu0 0.0
    %228 = vmatpush.msra.mxu0 0.0
    %229 = vmatpush.msra.mxu0 0.0
    %230 = vmatpush.msra.mxu0 0.0
    %231 = vmatpush.msra.mxu0 0.0
    %232 = vmatpush.msra.mxu0 0.0
    %233 = vmatpush.msra.mxu0 %v218
    %234 = vmatpush.msra.mxu0 %v216
    %235 = vmatpush.msra.mxu0 %v138
    %236 = vmatpush.msra.mxu0 %v135
    %237 = vmatmul.f32.gmra.mxu0 %v152
    %v238 = vpop.f32.mrf.mxu0
    %v239 = vadd.f32 0.0, %v238
    %240 = vmatmul.f32.gmra.mxu0 %v155
    %v241 = vpop.f32.mrf.mxu0
    %v242 = vadd.f32 0.0, %v241
    %243 = vdwg.mxu0
    %v244 = vmul.f32 %v94, %v239
    %v245 = vmul.f32 %v95, %v242
    %v246 = vmul.f32 %v244, 268.005
    %v247 = vmul.f32 %v245, 268.005
    %v248 = vsub.f32 %v246, 11.2457
    %v249 = vsub.f32 %v247, 11.2457
    %v250 = vtanh.pop %v248
    %v251 = vtanh.pop %v249
    %v252 = vadd.f32 %v250, 1.0
    %v253 = vadd.f32 %v251, 1.0
    %vm254 = vcmp.gt.f32.partialorder %v244, 10.7
    %vm255 = vcmp.gt.f32.partialorder %v245, 10.7
    %v256 = vsel %vm254, 1.0, %v252
    %v257 = vsel %vm255, 1.0, %v253
    %v258 = vpack.c.bf16 %v256, %v256
    %v259 = vpack.c.bf16 %v257, %v257
    %s260 = scalar_lea.vmem %s3, 8
    %261 = vst.msk [vmem:[%s260] sm:$0xf] %vm196, %v258
    %262 = vst.msk [vmem:[%s260 + $0x4] sm:$0xf] %vm196, %v259
    %v263 = vsel %vm98, %v256, -inf
    %v264 = vsel %vm98, %v257, -inf
    %v265 = vmax.f32 %v263, %v264
    %266 = vmax.xlane.f32.xlu0 %v265
    %v267 = vpop.xlane.xlu0 %266
    %v268 = vrot.slane %v267, 4
    %v269 = vmax.f32 %v267, %v268
    %v270 = vrot.slane %v269, 2
    %v271 = vmax.f32 %v269, %v270
    %v272 = vrot.slane %v271, 1
    %v273 = vmax.f32 %v271, %v272
    %s274 = vtos %v273
    %v275 = vstv %s274
    %v276 = vmax.f32 %v212, %v275
    %vm277 = vcmask 0
    %278 = vst.msk [vmem:[#allocation8] sm:$0x1] %vm277, %v276
    // Predicated region
    $region26: #{xdog.1} parent=1 // pred_check
      _
    $region27: #{xdog.1} parent=1 // pred_check_branch
      %280 = sbr.rel (0) target = $region29
    $region28: #{xdog.1} parent=1 // pred_region
      _
    $region29: #{xdog.1} parent=1 // pred_fallthru
      _
    // Predicated region
    $region30: #{xdog.1} parent=1 // pred_check
      _
    $region31: #{xdog.1} parent=1 // pred_check_branch
      %282 = sbr.rel (0) target = $region33
    $region32: #{xdog.1} parent=1 // pred_region
      %284 = vsyncadd [#allocation4], 0
      %s286 = sshll.u32 [#allocation8], 4
      %s287 = int_to_ptr.vmem [resolvable:$true] %s286
      %s288 = sshll.u32 %s4, 4
      %s289 = int_to_ptr.hbm [resolvable:$true] %s288
      %291 = dma.vmem_to_hbm [thread:$0]  %s287, 16, %s289, [#allocation4]
    $region33: #{xdog.1} parent=1 // pred_fallthru
      _
    // Predicated region
    $region34: #{xdog.1} parent=1 // pred_check
      _
    $region35: #{xdog.1} parent=1 // pred_check_branch
      %293 = sbr.rel (0) target = $region37
    $region36: #{xdog.1} parent=1 // pred_region
      _
    $region37: #{xdog.1} parent=1 // pred_fallthru
      _
    // Predicated region
    $region38: #{xdog.1} parent=1 // pred_check
      _
    $region39: #{xdog.1} parent=1 // pred_check_branch
      %295 = sbr.rel (0) target = $region41
    $region40: #{xdog.1} parent=1 // pred_region
      %297 = dma.done [#allocation4], 16
    $region41: #{xdog.1} parent=1 // pred_fallthru
      _
    %298 = vsyncpa [#allocation3], 1
    %299 = vsyncpa [#allocation6], 1
    %300 = vsyncpa [#allocation4], 1

</llo_original>
